<compile_context>
chip_gen: v7x
topology: tpu7x:2x2x1
jax: 0.10.0
libtpu: 0.0.40
codegen_flags: <defaults>
</compile_context>

<pallas_src>
import functools

import jax
import jax.numpy as jnp
from jax.experimental import pallas as pl
from jax.experimental.pallas import tpu as pltpu


def _round_up(n, m):
    return ((n + m - 1) // m) * m


def _g_kernel(x_ref, k_ref, wx_ref, wk_ref, b1_ref, w2_ref, b2_ref, out_ref, *, hidden):
    # ---- fused first layer: h = relu(x @ [w1a_x | w2a] + k @ [w1a_k | 0] + [b1a | b2a])
    h = jnp.dot(x_ref[...], wx_ref[...], preferred_element_type=jnp.float32)
    h = h + jnp.dot(k_ref[...], wk_ref[...], preferred_element_type=jnp.float32)
    h = jnp.maximum(h + b1_ref[...], 0.0)  # ReLU; Dropout(0.1) = identity in eval mode

    # ---- fused second layer: block-diagonal [w1b 0; 0 w2b], zero-padded to 128 lanes
    z = jnp.dot(h.astype(jnp.bfloat16), w2_ref[...],
                preferred_element_type=jnp.float32) + b2_ref[...]

    # Sigmoid only on the g1 columns (first `hidden` lanes); g2 columns stay linear.
    col = jax.lax.broadcasted_iota(jnp.int32, z.shape, 1)
    out_ref[...] = jnp.where(col < hidden, jax.nn.sigmoid(z), z).astype(out_ref.dtype)


def init_params(key, x_dim, k_dim, h_dim, hidden_channels=None):
    """Deterministic init mirroring the PyTorch module's parameter shapes.
    Weights are returned already transposed to (in, out)."""
    hidden = hidden_channels if hidden_channels else min(x_dim, k_dim, h_dim)
    ks = jax.random.split(key, 8)

    def linear(kw, kb, fan_in, fan_out):
        bound = 1.0 / jnp.sqrt(fan_in)
        w = jax.random.uniform(kw, (fan_in, fan_out), jnp.float32, -bound, bound)
        b = jax.random.uniform(kb, (1, fan_out), jnp.float32, -bound, bound)
        return w, b

    # g1: Linear(x_dim+k_dim, hidden), Linear(hidden, hidden)
    w1a, b1a = linear(ks[0], ks[1], x_dim + k_dim, hidden)
    w1b, b1b = linear(ks[2], ks[3], hidden, hidden)
    # g2: Linear(x_dim, hidden), Linear(hidden, h_dim)
    w2a, b2a = linear(ks[4], ks[5], x_dim, hidden)
    w2b, b2b = linear(ks[6], ks[7], hidden, h_dim)
    return (w1a, b1a, w1b, b1b, w2a, b2a, w2b, b2b)


def prepare_params(params, x_dim, k_dim, h_dim, hidden):
    """One-time weight fusion / padding / bf16 cast for the Pallas kernel."""
    w1a, b1a, w1b, b1b, w2a, b2a, w2b, b2b = params
    out_width = hidden + h_dim
    out_pad = _round_up(out_width, 128)

    # First layer: x sees [w1a_x | w2a]; k sees [w1a_k | 0]  (both width 2*hidden).
    w1a_x, w1a_k = w1a[:x_dim], w1a[x_dim:]
    wx = jnp.concatenate([w1a_x, w2a], axis=1).astype(jnp.bfloat16)
    wk = jnp.concatenate([w1a_k, jnp.zeros((k_dim, hidden), jnp.float32)],
                         axis=1).astype(jnp.bfloat16)
    b1 = jnp.concatenate([b1a, b2a], axis=1)  # f32

    # Second layer: block-diagonal [w1b 0; 0 w2b], padded to out_pad lanes.
    w2 = jnp.zeros((2 * hidden, out_pad), jnp.float32)
    w2 = w2.at[:hidden, :hidden].set(w1b).at[hidden:, hidden:out_width].set(w2b)
    w2 = w2.astype(jnp.bfloat16)
    b2 = jnp.zeros((1, out_pad), jnp.float32)
    b2 = b2.at[:, :hidden].set(b1b).at[:, hidden:out_width].set(b2b)
    return wx, wk, b1, w2, b2


def g_forward(x, k, prepared, hidden, h_dim):
    """x: (B, x_dim), k: (B, k_dim).  Returns (g1_out: (B, hidden), g2_out: (B, h_dim))."""
    wx, wk, b1, w2, b2 = prepared
    B, x_dim = x.shape
    k_dim = k.shape[1]
    two_h = wx.shape[1]
    out_pad = w2.shape[1]

    # Batch tiling: one block for small B, 512-row blocks for large B.
    if B <= 512:
        bm = _round_up(B, 8)
        b_pad = bm
    else:
        bm = 512
        b_pad = _round_up(B, bm)
    n_blocks = b_pad // bm

    xb = x.astype(jnp.bfloat16)
    kb = k.astype(jnp.bfloat16)
    if b_pad != B:
        pad = ((0, b_pad - B), (0, 0))
        xb = jnp.pad(xb, pad)
        kb = jnp.pad(kb, pad)

    out = pl.pallas_call(
        functools.partial(_g_kernel, hidden=hidden),
        out_shape=jax.ShapeDtypeStruct((b_pad, out_pad), jnp.float32),
        grid=(n_blocks,),
        in_specs=[
            pl.BlockSpec((bm, x_dim), lambda i: (i, 0)),        # x  (batch-tiled)
            pl.BlockSpec((bm, k_dim), lambda i: (i, 0)),        # k  (batch-tiled)
            pl.BlockSpec((x_dim, two_h), lambda i: (0, 0)),     # Wx (resident)
            pl.BlockSpec((k_dim, two_h), lambda i: (0, 0)),     # Wk (resident)
            pl.BlockSpec((1, two_h), lambda i: (0, 0)),         # b1 (resident)
            pl.BlockSpec((two_h, out_pad), lambda i: (0, 0)),   # W2 (resident)
            pl.BlockSpec((1, out_pad), lambda i: (0, 0)),       # b2 (resident)
        ],
        out_specs=pl.BlockSpec((bm, out_pad), lambda i: (i, 0)),
        compiler_params=pltpu.CompilerParams(
            dimension_semantics=("parallel",)),
    )(xb, kb, wx, wk, b1, w2, b2)

    out = out[:B]
    return out[:, :hidden], out[:, hidden:hidden + h_dim]


if __name__ == "__main__":
    # Small shapes consistent with the module: x_dim=32, k_dim=32, h_dim=32,
    # hidden_channels = min(x_dim, k_dim, h_dim) = 32, batch = 8.
    x_dim, k_dim, h_dim, B = 32, 32, 32, 8
    hidden = min(x_dim, k_dim, h_dim)

    key = jax.random.PRNGKey(0)
    kx, kk, kp = jax.random.split(key, 3)
    x = jax.random.normal(kx, (B, x_dim), jnp.float32)
    k = jax.random.normal(kk, (B, k_dim), jnp.float32)
    params = init_params(kp, x_dim, k_dim, h_dim)
    prepared = prepare_params(params, x_dim, k_dim, h_dim, hidden)

    out1, out2 = g_forward(x, k, prepared, hidden, h_dim)
    jax.block_until_ready((out1, out2))

    # Sanity check against a plain-JAX reference of the same (bf16-dot) math.
    wx, wk, b1, w2, b2 = prepared
    xb = x.astype(jnp.bfloat16)
    kb = k.astype(jnp.bfloat16)
    h_ref = jnp.maximum(
        jnp.dot(xb, wx, preferred_element_type=jnp.float32)
        + jnp.dot(kb, wk, preferred_element_type=jnp.float32) + b1, 0.0)
    z_ref = jnp.dot(h_ref.astype(jnp.bfloat16), w2,
                    preferred_element_type=jnp.float32) + b2
    ref1 = jax.nn.sigmoid(z_ref[:, :hidden])
    ref2 = z_ref[:, hidden:hidden + h_dim]

    assert out1.shape == (B, hidden) and out2.shape == (B, h_dim)
    assert jnp.allclose(out1, ref1, atol=1e-3), float(jnp.max(jnp.abs(out1 - ref1)))
    assert jnp.allclose(out2, ref2, atol=1e-3), float(jnp.max(jnp.abs(out2 - ref2)))

    print("KERNEL_OK")
</pallas_src>

<mosaic_0001>
module attributes {stable_mosaic.version = 11 : i64} {
  func.func @_g_kernel(%arg0: i32, %arg1: memref<8x32xbf16, #tpu.memory_space<vmem>>, %arg2: memref<8x32xbf16, #tpu.memory_space<vmem>>, %arg3: memref<32x64xbf16, #tpu.memory_space<vmem>>, %arg4: memref<32x64xbf16, #tpu.memory_space<vmem>>, %arg5: memref<1x64xf32, #tpu.memory_space<vmem>>, %arg6: memref<64x128xbf16, #tpu.memory_space<vmem>>, %arg7: memref<1x128xf32, #tpu.memory_space<vmem>>, %arg8: memref<8x128xf32, #tpu.memory_space<vmem>>) attributes {dimension_semantics = [#tpu.dimension_semantics<parallel>], iteration_bounds = array<i64: 1>, scalar_prefetch = 0 : i64, scratch_operands = 0 : i64, tpu.core_type = #tpu.core_type<tc>, window_params = [{transform_indices = @transform_0, window_bounds = array<i64: 8, 32>}, {transform_indices = @transform_1, window_bounds = array<i64: 8, 32>}, {pipeline_mode = #tpu.pipeline_mode<synchronous>, transform_indices = @transform_2, window_bounds = array<i64: 32, 64>}, {pipeline_mode = #tpu.pipeline_mode<synchronous>, transform_indices = @transform_3, window_bounds = array<i64: 32, 64>}, {pipeline_mode = #tpu.pipeline_mode<synchronous>, transform_indices = @transform_4, window_bounds = array<i64: 1, 64>}, {pipeline_mode = #tpu.pipeline_mode<synchronous>, transform_indices = @transform_5, window_bounds = array<i64: 64, 128>}, {pipeline_mode = #tpu.pipeline_mode<synchronous>, transform_indices = @transform_6, window_bounds = array<i64: 1, 128>}, {transform_indices = @transform_7, window_bounds = array<i64: 8, 128>}]} {
    %c0 = arith.constant 0 : index
    %c0_0 = arith.constant 0 : index
    %0 = vector.load %arg1[%c0, %c0_0] : memref<8x32xbf16, #tpu.memory_space<vmem>>, vector<8x32xbf16>
    %c0_1 = arith.constant 0 : index
    %c0_2 = arith.constant 0 : index
    %1 = vector.load %arg3[%c0_1, %c0_2] : memref<32x64xbf16, #tpu.memory_space<vmem>>, vector<32x64xbf16>
    %cst = arith.constant dense<0.000000e+00> : vector<8x64xf32>
    %2 = tpu.matmul %0, %1, %cst {dimension_numbers = #tpu.dot_dimension_numbers<[1], [0], [0], [1], [0, 0, 1, 1], [], []>} : vector<8x32xbf16>, vector<32x64xbf16>, vector<8x64xf32> -> vector<8x64xf32>
    %c0_3 = arith.constant 0 : index
    %c0_4 = arith.constant 0 : index
    %3 = vector.load %arg2[%c0_3, %c0_4] : memref<8x32xbf16, #tpu.memory_space<vmem>>, vector<8x32xbf16>
    %c0_5 = arith.constant 0 : index
    %c0_6 = arith.constant 0 : index
    %4 = vector.load %arg4[%c0_5, %c0_6] : memref<32x64xbf16, #tpu.memory_space<vmem>>, vector<32x64xbf16>
    %cst_7 = arith.constant dense<0.000000e+00> : vector<8x64xf32>
    %5 = tpu.matmul %3, %4, %cst_7 {dimension_numbers = #tpu.dot_dimension_numbers<[1], [0], [0], [1], [0, 0, 1, 1], [], []>} : vector<8x32xbf16>, vector<32x64xbf16>, vector<8x64xf32> -> vector<8x64xf32>
    %6 = arith.addf %2, %5 : vector<8x64xf32>
    %c0_8 = arith.constant 0 : index
    %c0_9 = arith.constant 0 : index
    %7 = vector.load %arg5[%c0_8, %c0_9] : memref<1x64xf32, #tpu.memory_space<vmem>>, vector<1x64xf32>
    %8 = vector.broadcast %7 : vector<1x64xf32> to vector<8x64xf32>
    %9 = arith.addf %6, %8 : vector<8x64xf32>
    %cst_10 = arith.constant 0.000000e+00 : f32
    %10 = vector.broadcast %cst_10 : f32 to vector<8x64xf32>
    %11 = arith.maximumf %9, %10 : vector<8x64xf32>
    %12 = arith.truncf %11 : vector<8x64xf32> to vector<8x64xbf16>
    %c0_11 = arith.constant 0 : index
    %c0_12 = arith.constant 0 : index
    %13 = vector.load %arg6[%c0_11, %c0_12] : memref<64x128xbf16, #tpu.memory_space<vmem>>, vector<64x128xbf16>
    %cst_13 = arith.constant dense<0.000000e+00> : vector<8x128xf32>
    %14 = tpu.matmul %12, %13, %cst_13 {dimension_numbers = #tpu.dot_dimension_numbers<[1], [0], [0], [1], [0, 0, 1, 1], [], []>} : vector<8x64xbf16>, vector<64x128xbf16>, vector<8x128xf32> -> vector<8x128xf32>
    %c0_14 = arith.constant 0 : index
    %c0_15 = arith.constant 0 : index
    %15 = vector.load %arg7[%c0_14, %c0_15] : memref<1x128xf32, #tpu.memory_space<vmem>>, vector<1x128xf32>
    %16 = vector.broadcast %15 : vector<1x128xf32> to vector<8x128xf32>
    %17 = arith.addf %14, %16 : vector<8x128xf32>
    %18 = tpu.iota {dimensions = array<i32: 1>} : vector<8x128xi32>
    %c32_i32 = arith.constant 32 : i32
    %19 = vector.broadcast %c32_i32 : i32 to vector<8x128xi32>
    %20 = arith.cmpi slt, %18, %19 : vector<8x128xi32>
    %21 = arith.negf %17 : vector<8x128xf32>
    %22 = math.exp %21 : vector<8x128xf32>
    %cst_16 = arith.constant 1.000000e+00 : f32
    %23 = vector.broadcast %cst_16 : f32 to vector<8x128xf32>
    %24 = arith.addf %23, %22 : vector<8x128xf32>
    %25 = arith.divf %23, %24 : vector<8x128xf32>
    %26 = arith.select %20, %25, %17 : vector<8x128xi1>, vector<8x128xf32>
    %c0_17 = arith.constant 0 : index
    %c0_18 = arith.constant 0 : index
    %27 = vector.load %arg8[%c0_17, %c0_18] : memref<8x128xf32, #tpu.memory_space<vmem>>, vector<8x128xf32>
    tpu.vector_store %arg8[%c0_17, %c0_18], %26 {strides = array<i32>} : memref<8x128xf32, #tpu.memory_space<vmem>>, vector<8x128xf32>,
    return
  }
  func.func @transform_0(%arg0: i32) -> (i32, i32) {
    %c0_i32 = arith.constant 0 : i32
    %c0_i32_0 = arith.constant 0 : i32
    return %arg0, %c0_i32 : i32, i32
  }
  func.func @transform_1(%arg0: i32) -> (i32, i32) {
    %c0_i32 = arith.constant 0 : i32
    %c0_i32_0 = arith.constant 0 : i32
    return %arg0, %c0_i32 : i32, i32
  }
  func.func @transform_2(%arg0: i32) -> (i32, i32) {
    %c0_i32 = arith.constant 0 : i32
    %c0_i32_0 = arith.constant 0 : i32
    %c0_i32_1 = arith.constant 0 : i32
    return %c0_i32, %c0_i32_0 : i32, i32
  }
  func.func @transform_3(%arg0: i32) -> (i32, i32) {
    %c0_i32 = arith.constant 0 : i32
    %c0_i32_0 = arith.constant 0 : i32
    %c0_i32_1 = arith.constant 0 : i32
    return %c0_i32, %c0_i32_0 : i32, i32
  }
  func.func @transform_4(%arg0: i32) -> (i32, i32) {
    %c0_i32 = arith.constant 0 : i32
    %c0_i32_0 = arith.constant 0 : i32
    %c0_i32_1 = arith.constant 0 : i32
    return %c0_i32, %c0_i32_0 : i32, i32
  }
  func.func @transform_5(%arg0: i32) -> (i32, i32) {
    %c0_i32 = arith.constant 0 : i32
    %c0_i32_0 = arith.constant 0 : i32
    %c0_i32_1 = arith.constant 0 : i32
    return %c0_i32, %c0_i32_0 : i32, i32
  }
  func.func @transform_6(%arg0: i32) -> (i32, i32) {
    %c0_i32 = arith.constant 0 : i32
    %c0_i32_0 = arith.constant 0 : i32
    %c0_i32_1 = arith.constant 0 : i32
    return %c0_i32, %c0_i32_0 : i32, i32
  }
  func.func @transform_7(%arg0: i32) -> (i32, i32) {
    %c0_i32 = arith.constant 0 : i32
    %c0_i32_0 = arith.constant 0 : i32
    return %arg0, %c0_i32 : i32, i32
  }
}

</mosaic_0001>

<llo_original>
// kernel: tpu_custom_call.1
$region0: #{tpu_custom_call.1}
  #allocation0 [shape = 'u32[]', space=smem, size = 0x4, offset = 0x4, fixed_abs, tag = 'smem constant byte address 0x4 - core index']
  #allocation1 [shape = 'u32[144,128]{1,0:T(1,128)}', space=vmem, size = 0x12000, scoped, tag = 'internal scratch']
  %s0 = inlined_call_operand.hbm [shape: bf16[8,32], index: 0, kind: input, shape index: {}]
  %s1 = inlined_call_operand.hbm [shape: bf16[8,32], index: 1, kind: input, shape index: {}]
  %s2 = inlined_call_operand.hbm [shape: bf16[32,64], index: 2, kind: input, shape index: {}]
  %s3 = inlined_call_operand.hbm [shape: bf16[32,64], index: 3, kind: input, shape index: {}]
  %s4 = inlined_call_operand.vmem [shape: f32[1,64], index: 4, kind: input, shape index: {}]
  %s5 = inlined_call_operand.hbm [shape: bf16[64,128], index: 5, kind: input, shape index: {}]
  %s6 = inlined_call_operand.vmem [shape: f32[1,128], index: 6, kind: input, shape index: {}]
  %s7 = inlined_call_operand.hbm [shape: f32[8,128], index: 7, kind: output, shape index: {}]
  %s8 = sld [smem:[#allocation0]]
  $region58: #{tpu_custom_call.1} parent=0
    _
  %s10 = ssub.s32 1, %s8
  %s11 = scalar_select 0, %s10, %s8
  $region1: #{tpu_custom_call.1} parent=0
    #allocation2 [shape = 'u8[2048]{0}', space=vmem, size = 0x800, scoped, tag = 'input window, operand 0, single buffered']
    #allocation3 [shape = 's32[1]{0}', space=sflag, size = 0x4, scoped, tag = 'scoped memory for tpu_custom_call.1']
    #allocation4 [shape = 's32[1]{0}', space=sflag, size = 0x4, scoped, tag = 'scoped memory for tpu_custom_call.1']
    #allocation5 [shape = 'u8[2048]{0}', space=vmem, size = 0x800, scoped, tag = 'input window, operand 1, single buffered']
    #allocation6 [shape = 's32[1]{0}', space=sflag, size = 0x4, scoped, tag = 'scoped memory for tpu_custom_call.1']
    #allocation7 [shape = 'u8[8192]{0}', space=vmem, size = 0x2000, scoped, tag = 'input window, operand 2, single buffered']
    #allocation8 [shape = 'u8[8192]{0}', space=vmem, size = 0x2000, scoped, tag = 'input window, operand 3, single buffered']
    #allocation9 [shape = 's32[1]{0}', space=sflag, size = 0x4, scoped, tag = 'scoped memory for tpu_custom_call.1']
    #allocation10 [shape = 'u8[16384]{0}', space=vmem, size = 0x4000, scoped, tag = 'input window, operand 5, single buffered']
    #allocation11 [shape = 'u8[4096]{0}', space=vmem, size = 0x1000, scoped, tag = 'output window, operand 0, single buffered']
    %12 = vsyncpa [#allocation3], 0
    %13 = vsyncpa [#allocation6], 0
    %14 = vsyncpa [#allocation9], 0
    %15 = vsyncpa [#allocation4], 0
    // Predicated region
    $region2: #{tpu_custom_call.1} parent=1 // pred_check
      _
    $region3: #{tpu_custom_call.1} parent=1 // pred_check_branch
      %17 = sbr.rel (0) target = $region5
    $region4: #{tpu_custom_call.1} parent=1 // pred_region
      %s19 = ssub.s32 64, 64
      %20 = vsyncadd [#allocation3], %s19
      %s22 = sshll.u32 [#allocation2], 4
      %s23 = int_to_ptr.vmem [resolvable:$true] %s22
      %25 = dma.hbm_to_vmem [thread:$0]  %s0, 64, %s23, [#allocation3]
    $region5: #{tpu_custom_call.1} parent=1 // pred_fallthru
      _
    // Predicated region
    $region6: #{tpu_custom_call.1} parent=1 // pred_check
      _
    $region7: #{tpu_custom_call.1} parent=1 // pred_check_branch
      %27 = sbr.rel (0) target = $region9
    $region8: #{tpu_custom_call.1} parent=1 // pred_region
      %s29 = ssub.s32 64, 64
      %30 = vsyncadd [#allocation6], %s29
      %s32 = sshll.u32 [#allocation5], 4
      %s33 = int_to_ptr.vmem [resolvable:$true] %s32
      %35 = dma.hbm_to_vmem [thread:$0]  %s1, 64, %s33, [#allocation6]
    $region9: #{tpu_custom_call.1} parent=1 // pred_fallthru
      _
    // Predicated region
    $region10: #{tpu_custom_call.1} parent=1 // pred_check
      _
    $region11: #{tpu_custom_call.1} parent=1 // pred_check_branch
      %37 = sbr.rel (0) target = $region13
    $region12: #{tpu_custom_call.1} parent=1 // pred_region
      %s39 = ssub.s32 256, 256
      %40 = vsyncadd [#allocation6], %s39
      %s41 = sshll.u32 [#allocation7], 4
      %s42 = int_to_ptr.vmem [resolvable:$true] %s41
      %47 = dma.hbm_to_vmem [thread:$0]  %s2, 256, %s42, [#allocation6], 64, 64, 4
    $region13: #{tpu_custom_call.1} parent=1 // pred_fallthru
      _
    // Predicated region
    $region14: #{tpu_custom_call.1} parent=1 // pred_check
      _
    $region15: #{tpu_custom_call.1} parent=1 // pred_check_branch
      %49 = sbr.rel (0) target = $region17
    $region16: #{tpu_custom_call.1} parent=1 // pred_region
      %s51 = ssub.s32 256, 256
      %52 = vsyncadd [#allocation9], %s51
      %s53 = sshll.u32 [#allocation8], 4
      %s54 = int_to_ptr.vmem [resolvable:$true] %s53
      %59 = dma.hbm_to_vmem [thread:$0]  %s3, 256, %s54, [#allocation9], 64, 64, 4
    $region17: #{tpu_custom_call.1} parent=1 // pred_fallthru
      _
    // Predicated region
    $region18: #{tpu_custom_call.1} parent=1 // pred_check
      _
    $region19: #{tpu_custom_call.1} parent=1 // pred_check_branch
      %61 = sbr.rel (0) target = $region21
    $region20: #{tpu_custom_call.1} parent=1 // pred_region
      _
    $region21: #{tpu_custom_call.1} parent=1 // pred_fallthru
      _
    // Predicated region
    $region22: #{tpu_custom_call.1} parent=1 // pred_check
      _
    $region23: #{tpu_custom_call.1} parent=1 // pred_check_branch
      %63 = sbr.rel (0) target = $region25
    $region24: #{tpu_custom_call.1} parent=1 // pred_region
      %s65 = ssub.s32 512, 512
      %66 = vsyncadd [#allocation9], %s65
      %s67 = sshll.u32 [#allocation10], 4
      %s68 = int_to_ptr.vmem [resolvable:$true] %s67
      %73 = dma.hbm_to_vmem [thread:$0]  %s5, 512, %s68, [#allocation9], 64, 64, 4
    $region25: #{tpu_custom_call.1} parent=1 // pred_fallthru
      _
    // Predicated region
    $region26: #{tpu_custom_call.1} parent=1 // pred_check
      _
    $region27: #{tpu_custom_call.1} parent=1 // pred_check_branch
      %75 = sbr.rel (0) target = $region29
    $region28: #{tpu_custom_call.1} parent=1 // pred_region
      _
    $region29: #{tpu_custom_call.1} parent=1 // pred_fallthru
      _
    // Predicated region
    $region30: #{tpu_custom_call.1} parent=1 // pred_check
      _
    $region31: #{tpu_custom_call.1} parent=1 // pred_check_branch
      %77 = sbr.rel (0) target = $region33
    $region32: #{tpu_custom_call.1} parent=1 // pred_region
      %78 = dma.done [#allocation3], 64
    $region33: #{tpu_custom_call.1} parent=1 // pred_fallthru
      _
    // Predicated region
    $region34: #{tpu_custom_call.1} parent=1 // pred_check
      _
    $region35: #{tpu_custom_call.1} parent=1 // pred_check_branch
      %80 = sbr.rel (0) target = $region37
    $region36: #{tpu_custom_call.1} parent=1 // pred_region
      %81 = dma.done [#allocation6], 64
    $region37: #{tpu_custom_call.1} parent=1 // pred_fallthru
      _
    // Predicated region
    $region38: #{tpu_custom_call.1} parent=1 // pred_check
      _
    $region39: #{tpu_custom_call.1} parent=1 // pred_check_branch
      %83 = sbr.rel (0) target = $region41
    $region40: #{tpu_custom_call.1} parent=1 // pred_region
      %84 = dma.done [#allocation6], 256
    $region41: #{tpu_custom_call.1} parent=1 // pred_fallthru
      _
    // Predicated region
    $region42: #{tpu_custom_call.1} parent=1 // pred_check
      _
    $region43: #{tpu_custom_call.1} parent=1 // pred_check_branch
      %86 = sbr.rel (0) target = $region45
    $region44: #{tpu_custom_call.1} parent=1 // pred_region
      %87 = dma.done [#allocation9], 256
    $region45: #{tpu_custom_call.1} parent=1 // pred_fallthru
      _
    // Predicated region
    $region46: #{tpu_custom_call.1} parent=1 // pred_check
      _
    $region47: #{tpu_custom_call.1} parent=1 // pred_check_branch
      %89 = sbr.rel (0) target = $region49
    $region48: #{tpu_custom_call.1} parent=1 // pred_region
      %90 = dma.done [#allocation9], 512
    $region49: #{tpu_custom_call.1} parent=1 // pred_fallthru
      _
    %v92 = vld [vmem:[#allocation2] sm:$0xf]
    %v93 = vld [vmem:[#allocation7] sm:$0xf]
    %v94 = vld [vmem:[#allocation7 + $0x4] sm:$0xf]
    %v95 = vld [vmem:[#allocation7 + $0x8] sm:$0xf]
    %v96 = vld [vmem:[#allocation7 + $0xc] sm:$0xf]
    %v97 = vld [vmem:[#allocation5] sm:$0xf]
    %v98 = vld [vmem:[#allocation8] sm:$0xf]
    %v99 = vld [vmem:[#allocation8 + $0x4] sm:$0xf]
    %v100 = vld [vmem:[#allocation8 + $0x8] sm:$0xf]
    %v101 = vld [vmem:[#allocation8 + $0xc] sm:$0xf]
    %v106 = vunpack.c.l.b16 %v98
    %v107 = vunpack.c.l.b16 %v99
    %v108 = vunpack.c.l.b16 %v100
    %v109 = vunpack.c.l.b16 %v101
    %v110 = vpack.c.b16 %v107, %v106
    %v111 = vpack.c.b16 %v109, %v108
    %vm114 = vcmask 261120
    %v116 = vsel %vm114, %v97, 0
    %118 = vmatprep.subr.bf16.mxu0 0
    %119 = vmatpush1.bf16.msra.mxu0 %v110
    %120 = vmatprep.subr.bf16.mxu0 0
    %121 = vmatpush1.bf16.msra.mxu0 %v111
    %122 = vmatprep.subr.bf16.mxu0 0
    %123 = vmatpush1.bf16.msra.mxu0 0
    %124 = vmatprep.subr.bf16.mxu0 0
    %125 = vmatpush1.bf16.msra.mxu0 0
    %126 = vmatprep.subr.bf16.mxu0 0
    %127 = vmatpush1.bf16.msra.mxu0 0
    %128 = vmatprep.subr.bf16.mxu0 0
    %129 = vmatpush1.bf16.msra.mxu0 0
    %130 = vmatprep.subr.bf16.mxu0 0
    %131 = vmatpush1.bf16.msra.mxu0 0
    %132 = vmatprep.subr.bf16.mxu0 0
    %133 = vmatpush1.bf16.msra.mxu0 0
    %134 = vmatprep.subr.bf16.mxu0 0
    %135 = vmatpush1.bf16.msra.mxu0 0
    %136 = vmatprep.subr.bf16.mxu0 0
    %137 = vmatpush1.bf16.msra.mxu0 0
    %138 = vmatprep.subr.bf16.mxu0 0
    %139 = vmatpush1.bf16.msra.mxu0 0
    %140 = vmatprep.subr.bf16.mxu0 0
    %141 = vmatpush1.bf16.msra.mxu0 0
    %142 = vmatprep.subr.bf16.mxu0 0
    %143 = vmatpush1.bf16.msra.mxu0 0
    %144 = vmatprep.subr.bf16.mxu0 0
    %145 = vmatpush1.bf16.msra.mxu0 0
    %146 = vmatprep.subr.bf16.mxu0 0
    %147 = vmatpush1.bf16.msra.mxu0 0
    %148 = vmatprep.subr.bf16.mxu0 0
    %149 = vmatpush1.bf16.msra.mxu0 0
    %150 = vmatprep.mubr.bf16.mxu0 0
    %151 = vmatmul.mubr.bf16.gmra.mrb[0].mxu0 %v116
    %v152 = vpop.f32.mrb[0].mxu0
    %v153 = vadd.f32 0.0, %v152
    %v154 = vpop.f32.mrb[0].mxu0
    %v155 = vpop.f32.mrb[0].mxu0
    %v156 = vpop.f32.mrb[0].mxu0
    %157 = vdwg.mxu0
    %v162 = vunpack.c.l.b16 %v93
    %v163 = vunpack.c.l.b16 %v94
    %v164 = vunpack.c.l.b16 %v95
    %v165 = vunpack.c.l.b16 %v96
    %v166 = vpack.c.b16 %v163, %v162
    %v167 = vpack.c.b16 %v165, %v164
    %v171 = vsel %vm114, %v92, 0
    %173 = vmatprep.subr.bf16.mxu0 0
    %174 = vmatpush1.bf16.msra.mxu0 %v166
    %175 = vmatprep.subr.bf16.mxu0 0
    %176 = vmatpush1.bf16.msra.mxu0 %v167
    %177 = vmatprep.subr.bf16.mxu0 0
    %178 = vmatpush1.bf16.msra.mxu0 0
    %179 = vmatprep.subr.bf16.mxu0 0
    %180 = vmatpush1.bf16.msra.mxu0 0
    %181 = vmatprep.subr.bf16.mxu0 0
    %182 = vmatpush1.bf16.msra.mxu0 0
    %183 = vmatprep.subr.bf16.mxu0 0
    %184 = vmatpush1.bf16.msra.mxu0 0
    %185 = vmatprep.subr.bf16.mxu0 0
    %186 = vmatpush1.bf16.msra.mxu0 0
    %187 = vmatprep.subr.bf16.mxu0 0
    %188 = vmatpush1.bf16.msra.mxu0 0
    %189 = vmatprep.subr.bf16.mxu0 0
    %190 = vmatpush1.bf16.msra.mxu0 0
    %191 = vmatprep.subr.bf16.mxu0 0
    %192 = vmatpush1.bf16.msra.mxu0 0
    %193 = vmatprep.subr.bf16.mxu0 0
    %194 = vmatpush1.bf16.msra.mxu0 0
    %195 = vmatprep.subr.bf16.mxu0 0
    %196 = vmatpush1.bf16.msra.mxu0 0
    %197 = vmatprep.subr.bf16.mxu0 0
    %198 = vmatpush1.bf16.msra.mxu0 0
    %199 = vmatprep.subr.bf16.mxu0 0
    %200 = vmatpush1.bf16.msra.mxu0 0
    %201 = vmatprep.subr.bf16.mxu0 0
    %202 = vmatpush1.bf16.msra.mxu0 0
    %203 = vmatprep.subr.bf16.mxu0 0
    %204 = vmatpush1.bf16.msra.mxu0 0
    %205 = vmatprep.mubr.bf16.mxu0 0
    %206 = vmatmul.mubr.bf16.gmra.mrb[0].mxu0 %v171
    %v207 = vpop.f32.mrb[0].mxu0
    %v208 = vadd.f32 %v153, %v207
    %v209 = vpop.f32.mrb[0].mxu0
    %v210 = vpop.f32.mrb[0].mxu0
    %v211 = vpop.f32.mrb[0].mxu0
    %212 = vdwg.mxu0
    %v213 = vld [vmem:[%s4] sm:$0x1]
    %v215 = vlaneseq
    %v216 = vshrl.u32 %v215, 7
    %v217 = vsub.s32 0, %v216
    %v218 = vrot.slane %v213, %v217
    %v220 = vadd.f32 %v208, %v218
    %v221 = vmax.f32 %v220, 0.0
    %v222 = vpack.c.bf16 %v221, %v221
    %v223 = vld [vmem:[#allocation10] sm:$0xf]
    %v224 = vld [vmem:[#allocation10 + $0x4] sm:$0xf]
    %v225 = vld [vmem:[#allocation10 + $0x8] sm:$0xf]
    %v226 = vld [vmem:[#allocation10 + $0xc] sm:$0xf]
    %v227 = vld [vmem:[#allocation10 + $0x10] sm:$0xf]
    %v228 = vld [vmem:[#allocation10 + $0x14] sm:$0xf]
    %v229 = vld [vmem:[#allocation10 + $0x18] sm:$0xf]
    %v230 = vld [vmem:[#allocation10 + $0x1c] sm:$0xf]
    %v231 = vld [vmem:[%s6] sm:$0x1]
    %v233 = vlaneseq
    %v234 = vshrl.u32 %v233, 7
    %v235 = vsub.s32 0, %v234
    %v236 = vrot.slane %v231, %v235
    %v246 = vunpack.c.l.b16 %v223
    %v247 = vunpack.c.l.b16 %v224
    %v248 = vunpack.c.l.b16 %v225
    %v249 = vunpack.c.l.b16 %v226
    %v250 = vunpack.c.l.b16 %v227
    %v251 = vunpack.c.l.b16 %v228
    %v252 = vunpack.c.l.b16 %v229
    %v253 = vunpack.c.l.b16 %v230
    %v254 = vpack.c.b16 %v247, %v246
    %v255 = vpack.c.b16 %v249, %v248
    %v256 = vpack.c.b16 %v251, %v250
    %v257 = vpack.c.b16 %v253, %v252
    %vm262 = vcmask 523264
    %v264 = vsel %vm262, %v222, 0
    %266 = vmatprep.subr.bf16.mxu0 0
    %267 = vmatpush1.bf16.msra.mxu0 %v254
    %268 = vmatprep.subr.bf16.mxu0 0
    %269 = vmatpush1.bf16.msra.mxu0 %v255
    %270 = vmatprep.subr.bf16.mxu0 0
    %271 = vmatpush1.bf16.msra.mxu0 %v256
    %272 = vmatprep.subr.bf16.mxu0 0
    %273 = vmatpush1.bf16.msra.mxu0 %v257
    %274 = vmatprep.subr.bf16.mxu0 0
    %275 = vmatpush1.bf16.msra.mxu0 0
    %276 = vmatprep.subr.bf16.mxu0 0
    %277 = vmatpush1.bf16.msra.mxu0 0
    %278 = vmatprep.subr.bf16.mxu0 0
    %279 = vmatpush1.bf16.msra.mxu0 0
    %280 = vmatprep.subr.bf16.mxu0 0
    %281 = vmatpush1.bf16.msra.mxu0 0
    %282 = vmatprep.subr.bf16.mxu0 0
    %283 = vmatpush1.bf16.msra.mxu0 0
    %284 = vmatprep.subr.bf16.mxu0 0
    %285 = vmatpush1.bf16.msra.mxu0 0
    %286 = vmatprep.subr.bf16.mxu0 0
    %287 = vmatpush1.bf16.msra.mxu0 0
    %288 = vmatprep.subr.bf16.mxu0 0
    %289 = vmatpush1.bf16.msra.mxu0 0
    %290 = vmatprep.subr.bf16.mxu0 0
    %291 = vmatpush1.bf16.msra.mxu0 0
    %292 = vmatprep.subr.bf16.mxu0 0
    %293 = vmatpush1.bf16.msra.mxu0 0
    %294 = vmatprep.subr.bf16.mxu0 0
    %295 = vmatpush1.bf16.msra.mxu0 0
    %296 = vmatprep.subr.bf16.mxu0 0
    %297 = vmatpush1.bf16.msra.mxu0 0
    %298 = vmatprep.mubr.bf16.mxu0 0
    %299 = vmatmul.mubr.bf16.gmra.mrb[0].mxu0 %v264
    %v300 = vpop.f32.mrb[0].mxu0
    %v301 = vadd.f32 %v236, %v300
    %v302 = vpop.f32.mrb[0].mxu0
    %v303 = vpop.f32.mrb[0].mxu0
    %v304 = vpop.f32.mrb[0].mxu0
    %305 = vdwg.mxu0
    %v306 = vlaneseq
    %v307 = vand.u32 %v306, 127
    %vm308 = vcmp.lt.s32.totalorder %v307, 32
    %v309 = vxor.u32 %v301, 2147483648
    %v310 = vmul.f32 %v309, 1.442695
    %v311 = vpow.pop %v310
    %v312 = vadd.f32 %v311, 1.0
    %v313 = vrcp.pop %v312
    %v314 = vmul.f32 1.0, %v313
    %v315 = vsel %vm308, %v314, %v301
    %316 = vst [vmem:[#allocation11] sm:$0xff] %v315
    // Predicated region
    $region50: #{tpu_custom_call.1} parent=1 // pred_check
      _
    $region51: #{tpu_custom_call.1} parent=1 // pred_check_branch
      %318 = sbr.rel (0) target = $region53
    $region52: #{tpu_custom_call.1} parent=1 // pred_region
      %s320 = ssub.s32 128, 128
      %321 = vsyncadd [#allocation4], %s320
      %s323 = sshll.u32 [#allocation11], 4
      %s324 = int_to_ptr.vmem [resolvable:$true] %s323
      %326 = dma.vmem_to_hbm [thread:$0]  %s324, 128, %s7, [#allocation4]
    $region53: #{tpu_custom_call.1} parent=1 // pred_fallthru
      _
    // Predicated region
    $region54: #{tpu_custom_call.1} parent=1 // pred_check
      _
    $region55: #{tpu_custom_call.1} parent=1 // pred_check_branch
      %328 = sbr.rel (0) target = $region57
    $region56: #{tpu_custom_call.1} parent=1 // pred_region
      %329 = dma.done [#allocation4], 128
    $region57: #{tpu_custom_call.1} parent=1 // pred_fallthru
      _
    %330 = vsyncpa [#allocation3], 1
    %331 = vsyncpa [#allocation6], 1
    %332 = vsyncpa [#allocation9], 1
    %333 = vsyncpa [#allocation4], 1

</llo_original>
